<compile_context>
chip_gen: v7x
topology: tpu7x:2x2x1
jax: 0.10.0
libtpu: 0.0.40
codegen_flags: <defaults>
</compile_context>

<pallas_src>
import functools

import jax
import jax.numpy as jnp
import numpy as np
from jax.experimental import pallas as pl
from jax.experimental.pallas import tpu as pltpu


def feedforward_kernel(x_ref, w1_ref, b1_ref, w2_ref, b2_ref, o_ref, *, eps):
    x = x_ref[...].astype(jnp.float32)                      # (TM, D)

    # --- LayerNorm (biased variance, eps inside rsqrt), f32.
    # gamma/beta are pre-folded into W1/b1 in the wrapper, so only the
    # normalization happens here.
    mean = jnp.mean(x, axis=-1, keepdims=True)
    var = jnp.mean((x - mean) ** 2, axis=-1, keepdims=True)
    xn = (x - mean) * jax.lax.rsqrt(var + eps)

    # --- Linear 1 (MXU: bf16 inputs, f32 accumulation); gamma/beta folded in.
    h = jnp.dot(xn.astype(jnp.bfloat16), w1_ref[...],
                preferred_element_type=jnp.float32) + b1_ref[...]   # (TM, H)

    # --- GELU, tanh approximation (0.5 factor folded into W2):
    #   gelu(h) ~= 0.5*h*(1 + tanh(sqrt(2/pi)*(h + 0.044715*h^3)))
    # ~6 VALU ops + 1 EUP tanh per element; deviation from the exact
    # erf-based nn.GELU() is <= ~3e-4.
    k = 0.7978845608028654          # sqrt(2/pi)
    kc = k * 0.044715
    h2 = h * h
    inner = h * (k + kc * h2)
    g = h * (1.0 + jnp.tanh(inner))                         # == 2*gelu(h)

    # TODO(synk): dropout rate is 0.0 in this module config (identity); a
    # nonzero rate would need pltpu.prng_seed + pltpu.stateful_bernoulli here.

    # --- Linear 2 (MXU); W2 pre-scaled by 0.5 to absorb the GELU factor.
    y = jnp.dot(g.astype(jnp.bfloat16), w2_ref[...],
                preferred_element_type=jnp.float32) + b2_ref[...]   # (TM, D)

    o_ref[...] = y.astype(o_ref.dtype)


def _pick_row_tiling(M):
    """Return (row_tile, padded_M).

    Prefers (a) no padding (tile divides M) and (b) >= 2 grid steps for
    large M so both v7x TensorCores engage.  TM is capped at 2048 so the
    f32 (TM, 128) hidden + GELU temporaries (~3-4 KB/row) stay well under
    every generation's scoped-VMEM default (16 MiB on v5e).
    """
    if M <= 1024:
        return M, M          # one step; full-extent block, no (8,128) constraint
    for t in (2048, 1024, 512, 256, 128, 64, 32, 16, 8):
        if M % t == 0:
            return t, M      # divides M -> no pad / no output slice
    # TODO(synk): ragged M — padding costs one extra HBM pass over the
    # activations; acceptable fallback, but tile-aligned M avoids it.
    t = 1024
    return t, ((M + t - 1) // t) * t


def feedforward_forward(x, params):
    B, N, D = x.shape
    H = params["w1"].shape[1]
    M = B * N

    # Flatten batch+seq into one row axis: the FFN is row-wise, so all rows
    # of all batch elements share the same (TM, D) pipeline.
    x2 = x.reshape(M, D)

    row_tile, m_pad = _pick_row_tiling(M)
    if m_pad != M:
        x2 = jnp.pad(x2, ((0, m_pad - M), (0, 0)))

    # Fold LayerNorm affine into Linear-1 and the GELU 0.5 into Linear-2
    # (trace-time, ~16 KiB of weights):
    #   (xn*gamma + beta) @ W1 + b1 == xn @ (diag(gamma) @ W1) + (beta @ W1 + b1)
    #   (0.5*gh) @ W2 + b2         == gh @ (0.5*W2) + b2
    gamma = params["ln_gamma"].astype(jnp.float32)
    beta = params["ln_beta"].astype(jnp.float32)
    w1f = params["w1"].astype(jnp.float32)
    w2f = params["w2"].astype(jnp.float32)

    w1 = (gamma[:, None] * w1f).astype(jnp.bfloat16)                  # (D, H)
    b1 = (beta @ w1f + params["b1"].astype(jnp.float32)).reshape(1, H)
    w2 = (0.5 * w2f).astype(jnp.bfloat16)                             # (H, D)
    b2 = params["b2"].astype(jnp.float32).reshape(1, D)

    kernel = functools.partial(feedforward_kernel, eps=1e-5)

    out2 = pl.pallas_call(
        kernel,
        out_shape=jax.ShapeDtypeStruct((m_pad, D), x.dtype),
        grid_spec=pltpu.PrefetchScalarGridSpec(
            num_scalar_prefetch=0,
            grid=(m_pad // row_tile,),
            in_specs=[
                pl.BlockSpec((row_tile, D), lambda i: (i, 0)),   # x rows
                pl.BlockSpec((D, H), lambda i: (0, 0)),          # W1 (gamma-folded)
                pl.BlockSpec((1, H), lambda i: (0, 0)),          # b1 (beta-folded)
                pl.BlockSpec((H, D), lambda i: (0, 0)),          # W2 (0.5-folded)
                pl.BlockSpec((1, D), lambda i: (0, 0)),          # b2
            ],
            out_specs=pl.BlockSpec((row_tile, D), lambda i: (i, 0)),
        ),
        compiler_params=pltpu.CompilerParams(
            dimension_semantics=("parallel",),
            vmem_limit_bytes=32 * 1024 * 1024,
        ),
    )(x2, w1, b1, w2, b2)

    if m_pad != M:
        out2 = out2[:M]
    return out2.reshape(B, N, D)


def feedforward_reference(x, params):
    """Pure-JAX f32 reference mirroring the PyTorch forward (exact erf GELU)."""
    mean = jnp.mean(x, axis=-1, keepdims=True)
    var = jnp.mean((x - mean) ** 2, axis=-1, keepdims=True)
    xn = (x - mean) / jnp.sqrt(var + 1e-5)
    xn = xn * params["ln_gamma"] + params["ln_beta"]
    h = xn @ params["w1"] + params["b1"]
    g = 0.5 * h * (1.0 + jax.lax.erf(h / np.float32(np.sqrt(2.0))))
    return g @ params["w2"] + params["b2"]


if __name__ == "__main__":
    B, N, DIM, HIDDEN = 2, 8, 32, 128

    key = jax.random.PRNGKey(0)
    kx, kg, kb, kw1, kb1, kw2, kb2 = jax.random.split(key, 7)

    x = jax.random.normal(kx, (B, N, DIM), dtype=jnp.float32)
    params = {
        "ln_gamma": 1.0 + 0.1 * jax.random.normal(kg, (DIM,), dtype=jnp.float32),
        "ln_beta": 0.1 * jax.random.normal(kb, (DIM,), dtype=jnp.float32),
        "w1": 0.1 * jax.random.normal(kw1, (DIM, HIDDEN), dtype=jnp.float32),
        "b1": 0.1 * jax.random.normal(kb1, (HIDDEN,), dtype=jnp.float32),
        "w2": 0.1 * jax.random.normal(kw2, (HIDDEN, DIM), dtype=jnp.float32),
        "b2": 0.1 * jax.random.normal(kb2, (DIM,), dtype=jnp.float32),
    }

    ff = jax.jit(feedforward_forward)
    out = ff(x, params)
    out = jax.block_until_ready(out)

    ref = feedforward_reference(x, params)
    # Tolerance accounts for bf16 MXU inputs (f32 accumulation) and the
    # tanh-approx GELU (<= ~3e-4 deviation from the exact erf form).
    np.testing.assert_allclose(np.asarray(out), np.asarray(ref),
                               rtol=2e-2, atol=2e-2)

    print("KERNEL_OK")
</pallas_src>

<mosaic_0001>
module attributes {stable_mosaic.version = 11 : i64} {
  func.func @feedforward_kernel(%arg0: i32, %arg1: memref<16x32xf32, #tpu.memory_space<vmem>>, %arg2: memref<32x128xbf16, #tpu.memory_space<vmem>>, %arg3: memref<1x128xf32, #tpu.memory_space<vmem>>, %arg4: memref<128x32xbf16, #tpu.memory_space<vmem>>, %arg5: memref<1x32xf32, #tpu.memory_space<vmem>>, %arg6: memref<16x32xf32, #tpu.memory_space<vmem>>) attributes {dimension_semantics = [#tpu.dimension_semantics<parallel>], iteration_bounds = array<i64: 1>, scalar_prefetch = 0 : i64, scratch_operands = 0 : i64, tpu.core_type = #tpu.core_type<tc>, window_params = [{transform_indices = @transform_0, window_bounds = array<i64: 16, 32>}, {pipeline_mode = #tpu.pipeline_mode<synchronous>, transform_indices = @transform_1, window_bounds = array<i64: 32, 128>}, {pipeline_mode = #tpu.pipeline_mode<synchronous>, transform_indices = @transform_2, window_bounds = array<i64: 1, 128>}, {pipeline_mode = #tpu.pipeline_mode<synchronous>, transform_indices = @transform_3, window_bounds = array<i64: 128, 32>}, {pipeline_mode = #tpu.pipeline_mode<synchronous>, transform_indices = @transform_4, window_bounds = array<i64: 1, 32>}, {transform_indices = @transform_5, window_bounds = array<i64: 16, 32>}]} {
    %c0 = arith.constant 0 : index
    %c0_0 = arith.constant 0 : index
    %0 = vector.load %arg1[%c0, %c0_0] : memref<16x32xf32, #tpu.memory_space<vmem>>, vector<16x32xf32>
    %cst = arith.constant dense<0.000000e+00> : vector<16xf32>
    %1 = vector.multi_reduction <add>, %0, %cst [1] : vector<16x32xf32> to vector<16xf32>
    %2 = vector.shape_cast %1 : vector<16xf32> to vector<16x1xf32>
    %cst_1 = arith.constant 3.200000e+01 : f32
    %3 = vector.broadcast %cst_1 : f32 to vector<16x1xf32>
    %4 = arith.divf %2, %3 : vector<16x1xf32>
    %5 = vector.broadcast %4 : vector<16x1xf32> to vector<16x32xf32>
    %6 = arith.subf %0, %5 : vector<16x32xf32>
    %7 = arith.mulf %6, %6 : vector<16x32xf32>
    %cst_2 = arith.constant dense<0.000000e+00> : vector<16xf32>
    %8 = vector.multi_reduction <add>, %7, %cst_2 [1] : vector<16x32xf32> to vector<16xf32>
    %9 = vector.shape_cast %8 : vector<16xf32> to vector<16x1xf32>
    %cst_3 = arith.constant 3.200000e+01 : f32
    %10 = vector.broadcast %cst_3 : f32 to vector<16x1xf32>
    %11 = arith.divf %9, %10 : vector<16x1xf32>
    %12 = vector.broadcast %4 : vector<16x1xf32> to vector<16x32xf32>
    %13 = arith.subf %0, %12 : vector<16x32xf32>
    %cst_4 = arith.constant 9.99999974E-6 : f32
    %14 = vector.broadcast %cst_4 : f32 to vector<16x1xf32>
    %15 = arith.addf %11, %14 : vector<16x1xf32>
    %16 = math.rsqrt %15 : vector<16x1xf32>
    %17 = vector.broadcast %16 : vector<16x1xf32> to vector<16x32xf32>
    %18 = arith.mulf %13, %17 : vector<16x32xf32>
    %19 = arith.truncf %18 : vector<16x32xf32> to vector<16x32xbf16>
    %c0_5 = arith.constant 0 : index
    %c0_6 = arith.constant 0 : index
    %20 = vector.load %arg2[%c0_5, %c0_6] : memref<32x128xbf16, #tpu.memory_space<vmem>>, vector<32x128xbf16>
    %cst_7 = arith.constant dense<0.000000e+00> : vector<16x128xf32>
    %21 = tpu.matmul %19, %20, %cst_7 {dimension_numbers = #tpu.dot_dimension_numbers<[1], [0], [0], [1], [0, 0, 1, 1], [], []>} : vector<16x32xbf16>, vector<32x128xbf16>, vector<16x128xf32> -> vector<16x128xf32>
    %c0_8 = arith.constant 0 : index
    %c0_9 = arith.constant 0 : index
    %22 = vector.load %arg3[%c0_8, %c0_9] : memref<1x128xf32, #tpu.memory_space<vmem>>, vector<1x128xf32>
    %23 = vector.broadcast %22 : vector<1x128xf32> to vector<16x128xf32>
    %24 = arith.addf %21, %23 : vector<16x128xf32>
    %25 = arith.mulf %24, %24 : vector<16x128xf32>
    %cst_10 = arith.constant 0.0356774069 : f32
    %26 = vector.broadcast %cst_10 : f32 to vector<16x128xf32>
    %27 = arith.mulf %26, %25 : vector<16x128xf32>
    %cst_11 = arith.constant 0.797884583 : f32
    %28 = vector.broadcast %cst_11 : f32 to vector<16x128xf32>
    %29 = arith.addf %28, %27 : vector<16x128xf32>
    %30 = arith.mulf %24, %29 : vector<16x128xf32>
    %31 = math.tanh %30 : vector<16x128xf32>
    %cst_12 = arith.constant 1.000000e+00 : f32
    %32 = vector.broadcast %cst_12 : f32 to vector<16x128xf32>
    %33 = arith.addf %32, %31 : vector<16x128xf32>
    %34 = arith.mulf %24, %33 : vector<16x128xf32>
    %35 = arith.truncf %34 : vector<16x128xf32> to vector<16x128xbf16>
    %c0_13 = arith.constant 0 : index
    %c0_14 = arith.constant 0 : index
    %36 = vector.load %arg4[%c0_13, %c0_14] : memref<128x32xbf16, #tpu.memory_space<vmem>>, vector<128x32xbf16>
    %cst_15 = arith.constant dense<0.000000e+00> : vector<16x32xf32>
    %37 = tpu.matmul %35, %36, %cst_15 {dimension_numbers = #tpu.dot_dimension_numbers<[1], [0], [0], [1], [0, 0, 1, 1], [], []>} : vector<16x128xbf16>, vector<128x32xbf16>, vector<16x32xf32> -> vector<16x32xf32>
    %c0_16 = arith.constant 0 : index
    %c0_17 = arith.constant 0 : index
    %38 = vector.load %arg5[%c0_16, %c0_17] : memref<1x32xf32, #tpu.memory_space<vmem>>, vector<1x32xf32>
    %39 = vector.broadcast %38 : vector<1x32xf32> to vector<16x32xf32>
    %40 = arith.addf %37, %39 : vector<16x32xf32>
    %c0_18 = arith.constant 0 : index
    %c0_19 = arith.constant 0 : index
    %41 = vector.load %arg6[%c0_18, %c0_19] : memref<16x32xf32, #tpu.memory_space<vmem>>, vector<16x32xf32>
    tpu.vector_store %arg6[%c0_18, %c0_19], %40 {strides = array<i32>} : memref<16x32xf32, #tpu.memory_space<vmem>>, vector<16x32xf32>,
    return
  }
  func.func @transform_0(%arg0: i32) -> (i32, i32) {
    %c0_i32 = arith.constant 0 : i32
    %c0_i32_0 = arith.constant 0 : i32
    return %arg0, %c0_i32 : i32, i32
  }
  func.func @transform_1(%arg0: i32) -> (i32, i32) {
    %c0_i32 = arith.constant 0 : i32
    %c0_i32_0 = arith.constant 0 : i32
    %c0_i32_1 = arith.constant 0 : i32
    return %c0_i32, %c0_i32_0 : i32, i32
  }
  func.func @transform_2(%arg0: i32) -> (i32, i32) {
    %c0_i32 = arith.constant 0 : i32
    %c0_i32_0 = arith.constant 0 : i32
    %c0_i32_1 = arith.constant 0 : i32
    return %c0_i32, %c0_i32_0 : i32, i32
  }
  func.func @transform_3(%arg0: i32) -> (i32, i32) {
    %c0_i32 = arith.constant 0 : i32
    %c0_i32_0 = arith.constant 0 : i32
    %c0_i32_1 = arith.constant 0 : i32
    return %c0_i32, %c0_i32_0 : i32, i32
  }
  func.func @transform_4(%arg0: i32) -> (i32, i32) {
    %c0_i32 = arith.constant 0 : i32
    %c0_i32_0 = arith.constant 0 : i32
    %c0_i32_1 = arith.constant 0 : i32
    return %c0_i32, %c0_i32_0 : i32, i32
  }
  func.func @transform_5(%arg0: i32) -> (i32, i32) {
    %c0_i32 = arith.constant 0 : i32
    %c0_i32_0 = arith.constant 0 : i32
    return %arg0, %c0_i32 : i32, i32
  }
}

</mosaic_0001>

<llo_original>
// kernel: feedforward_forward.1
$region0: #{feedforward_forward.1}
  #allocation0 [shape = 'u32[]', space=smem, size = 0x4, offset = 0x4, fixed_abs, tag = 'smem constant byte address 0x4 - core index']
  #allocation1 [shape = 'u32[144,128]{1,0:T(1,128)}', space=vmem, size = 0x12000, scoped, tag = 'internal scratch']
  %s0 = inlined_call_operand.vmem [shape: f32[16,32], index: 0, kind: input, shape index: {}]
  %s1 = inlined_call_operand.vmem [shape: bf16[32,128], index: 1, kind: input, shape index: {}]
  %s2 = inlined_call_operand.vmem [shape: f32[1,128], index: 2, kind: input, shape index: {}]
  %s3 = inlined_call_operand.vmem [shape: bf16[128,32], index: 3, kind: input, shape index: {}]
  %s4 = inlined_call_operand.vmem [shape: f32[1,32], index: 4, kind: input, shape index: {}]
  %s5 = inlined_call_operand.hbm [shape: f32[16,32], index: 5, kind: output, shape index: {}]
  %s6 = sld [smem:[#allocation0]]
  $region30: #{feedforward_forward.1} parent=0
    _
  %s8 = ssub.s32 1, %s6
  %s9 = scalar_select 0, %s8, %s6
  $region1: #{feedforward_forward.1} parent=0
    #allocation2 [shape = 'u8[8192]{0}', space=vmem, size = 0x2000, scoped, tag = 'output window, operand 0, single buffered']
    #allocation3 [shape = 's32[1]{0}', space=sflag, size = 0x4, scoped, tag = 'scoped memory for feedforward_forward.1']
    %10 = vsyncpa [#allocation3], 0
    // Predicated region
    $region2: #{feedforward_forward.1} parent=1 // pred_check
      _
    $region3: #{feedforward_forward.1} parent=1 // pred_check_branch
      %12 = sbr.rel (0) target = $region5
    $region4: #{feedforward_forward.1} parent=1 // pred_region
      _
    $region5: #{feedforward_forward.1} parent=1 // pred_fallthru
      _
    // Predicated region
    $region6: #{feedforward_forward.1} parent=1 // pred_check
      _
    $region7: #{feedforward_forward.1} parent=1 // pred_check_branch
      %14 = sbr.rel (0) target = $region9
    $region8: #{feedforward_forward.1} parent=1 // pred_region
      _
    $region9: #{feedforward_forward.1} parent=1 // pred_fallthru
      _
    // Predicated region
    $region10: #{feedforward_forward.1} parent=1 // pred_check
      _
    $region11: #{feedforward_forward.1} parent=1 // pred_check_branch
      %16 = sbr.rel (0) target = $region13
    $region12: #{feedforward_forward.1} parent=1 // pred_region
      _
    $region13: #{feedforward_forward.1} parent=1 // pred_fallthru
      _
    // Predicated region
    $region14: #{feedforward_forward.1} parent=1 // pred_check
      _
    $region15: #{feedforward_forward.1} parent=1 // pred_check_branch
      %18 = sbr.rel (0) target = $region17
    $region16: #{feedforward_forward.1} parent=1 // pred_region
      _
    $region17: #{feedforward_forward.1} parent=1 // pred_fallthru
      _
    // Predicated region
    $region18: #{feedforward_forward.1} parent=1 // pred_check
      _
    $region19: #{feedforward_forward.1} parent=1 // pred_check_branch
      %20 = sbr.rel (0) target = $region21
    $region20: #{feedforward_forward.1} parent=1 // pred_region
      _
    $region21: #{feedforward_forward.1} parent=1 // pred_fallthru
      _
    %v22 = vld [vmem:[%s0] sm:$0xff]
    %v23 = vld [vmem:[%s0 + $0x8] sm:$0xff]
    %vm24 = vcmask 261120
    %v25 = vsel %vm24, %v22, 0.0
    %26 = vadd.xlane.f32.xlu0 %v25
    %v27 = vpop.xlane.xlu0 %26
    %v28 = vsel %vm24, %v23, 0.0
    %29 = vadd.xlane.f32.xlu0 %v28
    %v30 = vpop.xlane.xlu0 %29
    %v31 = vrcp.pop 32.0
    %v32 = vmul.f32 %v27, %v31
    %v33 = vmul.f32 %v30, %v31
    %v34 = vsub.f32 %v22, %v32
    %v35 = vsub.f32 %v23, %v33
    %v36 = vmul.f32 %v34, %v34
    %v37 = vmul.f32 %v35, %v35
    %v38 = vsel %vm24, %v36, 0.0
    %39 = vadd.xlane.f32.xlu0 %v38
    %v40 = vpop.xlane.xlu0 %39
    %v41 = vsel %vm24, %v37, 0.0
    %42 = vadd.xlane.f32.xlu0 %v41
    %v43 = vpop.xlane.xlu0 %42
    %v44 = vmul.f32 %v40, %v31
    %v45 = vmul.f32 %v43, %v31
    %v46 = vadd.f32 %v44, 1e-05
    %v47 = vadd.f32 %v45, 1e-05
    %v48 = vrsqrt.pop %v46
    %v49 = vrsqrt.pop %v47
    %v50 = vmul.f32 %v34, %v48
    %v51 = vmul.f32 %v35, %v49
    %v52 = vpack.c.bf16 %v51, %v50
    %v53 = vld [vmem:[%s1] sm:$0xf]
    %v54 = vld [vmem:[%s1 + $0x4] sm:$0xf]
    %v55 = vld [vmem:[%s1 + $0x8] sm:$0xf]
    %v56 = vld [vmem:[%s1 + $0xc] sm:$0xf]
    %v57 = vld [vmem:[%s2] sm:$0x1]
    %v59 = vlaneseq
    %v60 = vshrl.u32 %v59, 7
    %v61 = vsub.s32 0, %v60
    %v62 = vrot.slane %v57, %v61
    %v68 = vunpack.c.l.b16 %v53
    %v69 = vunpack.c.l.b16 %v54
    %v70 = vunpack.c.l.b16 %v55
    %v71 = vunpack.c.l.b16 %v56
    %v72 = vpack.c.b16 %v69, %v68
    %v73 = vpack.c.b16 %v71, %v70
    %v77 = vsel %vm24, %v52, 0
    %79 = vmatprep.subr.bf16.mxu0 0
    %80 = vmatpush1.bf16.msra.mxu0 %v72
    %81 = vmatprep.subr.bf16.mxu0 0
    %82 = vmatpush1.bf16.msra.mxu0 %v73
    %83 = vmatprep.subr.bf16.mxu0 0
    %84 = vmatpush1.bf16.msra.mxu0 0
    %85 = vmatprep.subr.bf16.mxu0 0
    %86 = vmatpush1.bf16.msra.mxu0 0
    %87 = vmatprep.subr.bf16.mxu0 0
    %88 = vmatpush1.bf16.msra.mxu0 0
    %89 = vmatprep.subr.bf16.mxu0 0
    %90 = vmatpush1.bf16.msra.mxu0 0
    %91 = vmatprep.subr.bf16.mxu0 0
    %92 = vmatpush1.bf16.msra.mxu0 0
    %93 = vmatprep.subr.bf16.mxu0 0
    %94 = vmatpush1.bf16.msra.mxu0 0
    %95 = vmatprep.subr.bf16.mxu0 0
    %96 = vmatpush1.bf16.msra.mxu0 0
    %97 = vmatprep.subr.bf16.mxu0 0
    %98 = vmatpush1.bf16.msra.mxu0 0
    %99 = vmatprep.subr.bf16.mxu0 0
    %100 = vmatpush1.bf16.msra.mxu0 0
    %101 = vmatprep.subr.bf16.mxu0 0
    %102 = vmatpush1.bf16.msra.mxu0 0
    %103 = vmatprep.subr.bf16.mxu0 0
    %104 = vmatpush1.bf16.msra.mxu0 0
    %105 = vmatprep.subr.bf16.mxu0 0
    %106 = vmatpush1.bf16.msra.mxu0 0
    %107 = vmatprep.subr.bf16.mxu0 0
    %108 = vmatpush1.bf16.msra.mxu0 0
    %109 = vmatprep.subr.bf16.mxu0 0
    %110 = vmatpush1.bf16.msra.mxu0 0
    %111 = vmatprep.mubr.bf16.mxu0 0
    %112 = vmatmul.mubr.bf16.gmra.mrb[0].mxu0 %v77
    %v113 = vpop.f32.mrb[0].mxu0
    %v114 = vadd.f32 %v62, %v113
    %v115 = vpop.f32.mrb[0].mxu0
    %v116 = vpop.f32.mrb[0].mxu0
    %v117 = vadd.f32 %v62, %v116
    %v118 = vpop.f32.mrb[0].mxu0
    %119 = vdwg.mxu0
    %v120 = vmul.f32 %v114, %v114
    %v121 = vmul.f32 %v117, %v117
    %v122 = vmul.f32 %v120, 0.035677407
    %v123 = vmul.f32 %v121, 0.035677407
    %v124 = vadd.f32 %v122, 0.7978846
    %v125 = vadd.f32 %v123, 0.7978846
    %v126 = vmul.f32 %v114, %v124
    %v127 = vmul.f32 %v117, %v125
    %v128 = vtanh.pop %v126
    %v129 = vtanh.pop %v127
    %v130 = vadd.f32 %v128, 1.0
    %v131 = vadd.f32 %v129, 1.0
    %v132 = vmul.f32 %v114, %v130
    %v133 = vmul.f32 %v117, %v131
    %v134 = vpack.c.bf16 %v133, %v132
    %v135 = vld [vmem:[%s3] sm:$0xf]
    %v136 = vld [vmem:[%s3 + $0x4] sm:$0xf]
    %v137 = vld [vmem:[%s3 + $0x8] sm:$0xf]
    %v138 = vld [vmem:[%s3 + $0xc] sm:$0xf]
    %v139 = vld [vmem:[%s3 + $0x10] sm:$0xf]
    %v140 = vld [vmem:[%s3 + $0x14] sm:$0xf]
    %v141 = vld [vmem:[%s3 + $0x18] sm:$0xf]
    %v142 = vld [vmem:[%s3 + $0x1c] sm:$0xf]
    %v143 = vld [vmem:[%s3 + $0x20] sm:$0xf]
    %v144 = vld [vmem:[%s3 + $0x24] sm:$0xf]
    %v145 = vld [vmem:[%s3 + $0x28] sm:$0xf]
    %v146 = vld [vmem:[%s3 + $0x2c] sm:$0xf]
    %v147 = vld [vmem:[%s3 + $0x30] sm:$0xf]
    %v148 = vld [vmem:[%s3 + $0x34] sm:$0xf]
    %v149 = vld [vmem:[%s3 + $0x38] sm:$0xf]
    %v150 = vld [vmem:[%s3 + $0x3c] sm:$0xf]
    %v151 = vld [vmem:[%s4] sm:$0x1]
    %v153 = vlaneseq
    %v154 = vshrl.u32 %v153, 7
    %v155 = vsub.s32 0, %v154
    %v156 = vrot.slane %v151, %v155
    %v174 = vunpack.c.l.b16 %v135
    %v175 = vunpack.c.l.b16 %v136
    %v176 = vunpack.c.l.b16 %v137
    %v177 = vunpack.c.l.b16 %v138
    %v178 = vunpack.c.l.b16 %v139
    %v179 = vunpack.c.l.b16 %v140
    %v180 = vunpack.c.l.b16 %v141
    %v181 = vunpack.c.l.b16 %v142
    %v182 = vunpack.c.l.b16 %v143
    %v183 = vunpack.c.l.b16 %v144
    %v184 = vunpack.c.l.b16 %v145
    %v185 = vunpack.c.l.b16 %v146
    %v186 = vunpack.c.l.b16 %v147
    %v187 = vunpack.c.l.b16 %v148
    %v188 = vunpack.c.l.b16 %v149
    %v189 = vunpack.c.l.b16 %v150
    %v190 = vpack.c.b16 %v175, %v174
    %v191 = vpack.c.b16 %v177, %v176
    %v192 = vpack.c.b16 %v179, %v178
    %v193 = vpack.c.b16 %v181, %v180
    %v194 = vpack.c.b16 %v183, %v182
    %v195 = vpack.c.b16 %v185, %v184
    %v196 = vpack.c.b16 %v187, %v186
    %v197 = vpack.c.b16 %v189, %v188
    %206 = vmatprep.subr.bf16.mxu0 0
    %207 = vmatpush1.bf16.msra.mxu0 %v190
    %208 = vmatprep.subr.bf16.mxu0 0
    %209 = vmatpush1.bf16.msra.mxu0 %v191
    %210 = vmatprep.subr.bf16.mxu0 0
    %211 = vmatpush1.bf16.msra.mxu0 %v192
    %212 = vmatprep.subr.bf16.mxu0 0
    %213 = vmatpush1.bf16.msra.mxu0 %v193
    %214 = vmatprep.subr.bf16.mxu0 0
    %215 = vmatpush1.bf16.msra.mxu0 %v194
    %216 = vmatprep.subr.bf16.mxu0 0
    %217 = vmatpush1.bf16.msra.mxu0 %v195
    %218 = vmatprep.subr.bf16.mxu0 0
    %219 = vmatpush1.bf16.msra.mxu0 %v196
    %220 = vmatprep.subr.bf16.mxu0 0
    %221 = vmatpush1.bf16.msra.mxu0 %v197
    %222 = vmatprep.subr.bf16.mxu0 0
    %223 = vmatpush1.bf16.msra.mxu0 0
    %224 = vmatprep.subr.bf16.mxu0 0
    %225 = vmatpush1.bf16.msra.mxu0 0
    %226 = vmatprep.subr.bf16.mxu0 0
    %227 = vmatpush1.bf16.msra.mxu0 0
    %228 = vmatprep.subr.bf16.mxu0 0
    %229 = vmatpush1.bf16.msra.mxu0 0
    %230 = vmatprep.subr.bf16.mxu0 0
    %231 = vmatpush1.bf16.msra.mxu0 0
    %232 = vmatprep.subr.bf16.mxu0 0
    %233 = vmatpush1.bf16.msra.mxu0 0
    %234 = vmatprep.subr.bf16.mxu0 0
    %235 = vmatpush1.bf16.msra.mxu0 0
    %236 = vmatprep.subr.bf16.mxu0 0
    %237 = vmatpush1.bf16.msra.mxu0 0
    %238 = vmatprep.mubr.bf16.mxu0 0
    %239 = vmatmul.mubr.bf16.gmra.mrb[0].mxu0 %v134
    %v240 = vpop.f32.mrb[0].mxu0
    %v241 = vadd.f32 %v156, %v240
    %v242 = vpop.f32.mrb[0].mxu0
    %v243 = vpop.f32.mrb[0].mxu0
    %v244 = vadd.f32 %v156, %v243
    %v245 = vpop.f32.mrb[0].mxu0
    %246 = vdwg.mxu0
    %247 = vst.msk [vmem:[#allocation2] sm:$0xff] %vm24, %v241
    %248 = vst.msk [vmem:[#allocation2 + $0x8] sm:$0xff] %vm24, %v244
    // Predicated region
    $region22: #{feedforward_forward.1} parent=1 // pred_check
      _
    $region23: #{feedforward_forward.1} parent=1 // pred_check_branch
      %250 = sbr.rel (0) target = $region25
    $region24: #{feedforward_forward.1} parent=1 // pred_region
      %s252 = ssub.s32 256, 256
      %253 = vsyncadd [#allocation3], %s252
      %s254 = sshll.u32 [#allocation2], 4
      %s255 = int_to_ptr.vmem [resolvable:$true] %s254
      %260 = dma.vmem_to_hbm [thread:$0]  %s255, 256, %s5, [#allocation3], 128, 128, 8
    $region25: #{feedforward_forward.1} parent=1 // pred_fallthru
      _
    // Predicated region
    $region26: #{feedforward_forward.1} parent=1 // pred_check
      _
    $region27: #{feedforward_forward.1} parent=1 // pred_check_branch
      %262 = sbr.rel (0) target = $region29
    $region28: #{feedforward_forward.1} parent=1 // pred_region
      %263 = dma.done [#allocation3], 256
    $region29: #{feedforward_forward.1} parent=1 // pred_fallthru
      _
    %264 = vsyncpa [#allocation3], 1

</llo_original>
